<compile_context>
chip_gen: v6e
topology: v6e:2x2x1
jax: 0.10.0
libtpu: 0.0.40
codegen_flags: <defaults>
</compile_context>

<pallas_src>
import functools

import jax
import jax.numpy as jnp
from jax import lax
from jax.experimental import pallas as pl
from jax.experimental.pallas import tpu as pltpu

LANE = 128
SUBLANE = 8
# (2048, 128) f32 = 1 MiB per input per pipeline buffer -> 4 MiB total for the
# two double-buffered inputs: safely inside v5e's 16 MiB default scoped VMEM
# and v7x's 64 MiB physical VMEM, while big enough (>=512 rows) for ~85% of
# HBM roofline.
MAX_TILE_ROWS = 2048


def _rmse_partial_kernel(p_ref, t_ref, o_ref, *, tile_rows, valid_rows, need_mask):
    # VPU-only body: cast, diff, (optional) ragged-tail mask, square, and a
    # sublane-group reduction down to a single (8, 128) vreg of partial sums.
    d = p_ref[...].astype(jnp.float32) - t_ref[...].astype(jnp.float32)

    if need_mask:
        # Only the last grid block can be ragged; rows past `valid_rows` hold
        # unspecified data and must contribute exactly 0. jnp.where is a
        # lane-wise select, so garbage (even NaN/Inf) in masked rows is safe.
        row = lax.broadcasted_iota(jnp.int32, d.shape, 0)
        global_row = pl.program_id(0) * tile_rows + row
        d = jnp.where(global_row < valid_rows, d, jnp.float32(0.0))

    d2 = d * d
    # Leading-dim split is layout-preserving; the axis-0 sum is just vreg adds.
    partial = jnp.sum(d2.reshape(tile_rows // SUBLANE, SUBLANE, LANE), axis=0)
    o_ref[...] = partial.reshape(1, SUBLANE, LANE)


def rmse_loss(pred, target):
    assert pred.shape == target.shape, "pred/target shape mismatch"
    n = 1
    for s in pred.shape:
        n *= int(s)
    assert n > 0, "RMSELoss of an empty tensor"

    # Keep native dtype; cast to f32 inside the kernel (halves HBM reads for
    # bf16 inputs compared to a wrapper-side astype).
    pf = pred.reshape(-1)
    tf = target.reshape(-1)

    # Only pad when the flat length is not already a multiple of one (8,128)
    # vreg. Padded positions have pred == target == 0, contributing 0 to the
    # sum of squares; the divisor below stays the true element count.
    chunk = SUBLANE * LANE
    n_padded = ((n + chunk - 1) // chunk) * chunk
    if n_padded != n:
        # TODO(synk): a ragged tail could avoid this whole-array pad copy via a
        # manual-DMA tail block; for a loss-sized call the pad path is rare/cheap.
        pf = jnp.pad(pf, (0, n_padded - n))
        tf = jnp.pad(tf, (0, n_padded - n))

    rows = n_padded // LANE                 # multiple of 8
    tile_rows = min(MAX_TILE_ROWS, rows)    # multiple of 8, never exceeds rows
    grid = pl.cdiv(rows, tile_rows)
    need_mask = (rows % tile_rows) != 0     # only the last block can be ragged

    P = pf.reshape(rows, LANE)
    T = tf.reshape(rows, LANE)

    kernel = functools.partial(
        _rmse_partial_kernel,
        tile_rows=tile_rows,
        valid_rows=rows,
        need_mask=need_mask,
    )

    itemsize = jnp.dtype(pred.dtype).itemsize
    cost = pl.CostEstimate(
        flops=3 * n,
        transcendentals=0,
        bytes_accessed=2 * n_padded * itemsize + grid * SUBLANE * LANE * 4,
    )

    partials = pl.pallas_call(
        kernel,
        out_shape=jax.ShapeDtypeStruct((grid, SUBLANE, LANE), jnp.float32),
        grid_spec=pltpu.PrefetchScalarGridSpec(
            num_scalar_prefetch=0,
            grid=(grid,),
            in_specs=[
                pl.BlockSpec((tile_rows, LANE), lambda i: (i, 0)),
                pl.BlockSpec((tile_rows, LANE), lambda i: (i, 0)),
            ],
            out_specs=pl.BlockSpec((1, SUBLANE, LANE), lambda i: (i, 0, 0)),
        ),
        compiler_params=pltpu.CompilerParams(
            # Independent per-block partials -> parallel grid axis; on v7x this
            # lets both TensorCores stream HBM concurrently.
            dimension_semantics=("parallel",),
        ),
        cost_estimate=cost,
    )(P, T)

    # Tiny epilogue: cross-lane reduce over grid*1024 partial sums, then RMSE.
    return jnp.sqrt(jnp.sum(partials) / jnp.float32(n))


if __name__ == "__main__":
    key = jax.random.PRNGKey(0)
    k1, k2 = jax.random.split(key)
    # Small shapes consistent with a generic prediction tensor (e.g. NCHW).
    pred = jax.random.normal(k1, (2, 4, 16, 16), dtype=jnp.float32)
    target = jax.random.normal(k2, (2, 4, 16, 16), dtype=jnp.float32)

    out = rmse_loss(pred, target)
    out = jax.block_until_ready(out)

    # Reference check against plain JAX.
    ref = jnp.sqrt(jnp.mean((pred - target) ** 2))
    assert jnp.allclose(out, ref, rtol=1e-5, atol=1e-6), (out, ref)

    print("KERNEL_OK")
</pallas_src>

<mosaic_0001>
module attributes {stable_mosaic.version = 11 : i64} {
  func.func @_rmse_partial_kernel(%arg0: i32, %arg1: memref<16x128xf32, #tpu.memory_space<vmem>>, %arg2: memref<16x128xf32, #tpu.memory_space<vmem>>, %arg3: memref<1x8x128xf32, #tpu.memory_space<vmem>>) attributes {dimension_semantics = [#tpu.dimension_semantics<parallel>], iteration_bounds = array<i64: 1>, scalar_prefetch = 0 : i64, scratch_operands = 0 : i64, tpu.core_type = #tpu.core_type<tc>, window_params = [{transform_indices = @transform_0, window_bounds = array<i64: 16, 128>}, {transform_indices = @transform_1, window_bounds = array<i64: 16, 128>}, {transform_indices = @transform_2, window_bounds = array<i64: 1, 8, 128>}]} {
    %c0 = arith.constant 0 : index
    %c0_0 = arith.constant 0 : index
    %0 = vector.load %arg1[%c0, %c0_0] : memref<16x128xf32, #tpu.memory_space<vmem>>, vector<16x128xf32>
    %c0_1 = arith.constant 0 : index
    %c0_2 = arith.constant 0 : index
    %1 = vector.load %arg2[%c0_1, %c0_2] : memref<16x128xf32, #tpu.memory_space<vmem>>, vector<16x128xf32>
    %2 = arith.subf %0, %1 : vector<16x128xf32>
    %3 = arith.mulf %2, %2 : vector<16x128xf32>
    %4 = vector.shape_cast %3 : vector<16x128xf32> to vector<2x8x128xf32>
    %cst = arith.constant dense<0.000000e+00> : vector<8x128xf32>
    %5 = vector.multi_reduction <add>, %4, %cst [0] : vector<2x8x128xf32> to vector<8x128xf32>
    %6 = vector.shape_cast %5 : vector<8x128xf32> to vector<1x8x128xf32>
    %c0_3 = arith.constant 0 : index
    %c0_4 = arith.constant 0 : index
    %c0_5 = arith.constant 0 : index
    %7 = vector.load %arg3[%c0_3, %c0_4, %c0_5] : memref<1x8x128xf32, #tpu.memory_space<vmem>>, vector<1x8x128xf32>
    tpu.vector_store %arg3[%c0_3, %c0_4, %c0_5], %6 {strides = array<i32>} : memref<1x8x128xf32, #tpu.memory_space<vmem>>, vector<1x8x128xf32>,
    return
  }
  func.func @transform_0(%arg0: i32) -> (i32, i32) {
    %c0_i32 = arith.constant 0 : i32
    %c0_i32_0 = arith.constant 0 : i32
    return %arg0, %c0_i32 : i32, i32
  }
  func.func @transform_1(%arg0: i32) -> (i32, i32) {
    %c0_i32 = arith.constant 0 : i32
    %c0_i32_0 = arith.constant 0 : i32
    return %arg0, %c0_i32 : i32, i32
  }
  func.func @transform_2(%arg0: i32) -> (i32, i32, i32) {
    %c0_i32 = arith.constant 0 : i32
    %c0_i32_0 = arith.constant 0 : i32
    %c0_i32_1 = arith.constant 0 : i32
    return %arg0, %c0_i32, %c0_i32_0 : i32, i32, i32
  }
}

</mosaic_0001>

<llo_original>
// kernel: tpu_custom_call.1
$region0: #{tpu_custom_call.1}
  #allocation0 [shape = 'u32[]', space=smem, size = 0x4, offset = 0x4, fixed_abs, tag = 'smem constant byte address 0x4 - core index']
  #allocation1 [shape = 'u32[144,128]{1,0:T(1,128)}', space=vmem, size = 0x12000, scoped, tag = 'internal scratch']
  %s0 = inlined_call_operand.hbm [shape: f32[16,128], index: 0, kind: input, shape index: {}]
  %s1 = inlined_call_operand.hbm [shape: f32[16,128], index: 1, kind: input, shape index: {}]
  %s2 = inlined_call_operand.hbm [shape: f32[1,8,128], index: 2, kind: output, shape index: {}]
  %s3 = sld [smem:[#allocation0]]
  $region26: #{tpu_custom_call.1} parent=0
    _
  %s5 = ssub.s32 1, %s3
  %s6 = scalar_select 0, %s5, %s3
  $region1: #{tpu_custom_call.1} parent=0
    #allocation2 [shape = 'u8[8192]{0}', space=vmem, size = 0x2000, scoped, tag = 'input window, operand 0, single buffered']
    #allocation3 [shape = 's32[1]{0}', space=sflag, size = 0x4, scoped, tag = 'scoped memory for tpu_custom_call.1']
    #allocation4 [shape = 's32[1]{0}', space=sflag, size = 0x4, scoped, tag = 'scoped memory for tpu_custom_call.1']
    #allocation5 [shape = 'u8[8192]{0}', space=vmem, size = 0x2000, scoped, tag = 'input window, operand 1, single buffered']
    #allocation6 [shape = 's32[1]{0}', space=sflag, size = 0x4, scoped, tag = 'scoped memory for tpu_custom_call.1']
    #allocation7 [shape = 'u8[4096]{0}', space=vmem, size = 0x1000, scoped, tag = 'output window, operand 0, single buffered']
    %7 = vsyncpa [#allocation3], 0
    %8 = vsyncpa [#allocation6], 0
    %9 = vsyncpa [#allocation4], 0
    // Predicated region
    $region2: #{tpu_custom_call.1} parent=1 // pred_check
      _
    $region3: #{tpu_custom_call.1} parent=1 // pred_check_branch
      %11 = sbr.rel (0) target = $region5
    $region4: #{tpu_custom_call.1} parent=1 // pred_region
      %s13 = ssub.s32 256, 256
      %14 = vsyncadd [#allocation3], %s13
      %s15 = sshll.u32 [#allocation2], 4
      %s16 = int_to_ptr.vmem [resolvable:$true] %s15
      %21 = dma.hbm_to_vmem [thread:$0]  %s0, 256, %s16, [#allocation3], 128, 128, 8
    $region5: #{tpu_custom_call.1} parent=1 // pred_fallthru
      _
    // Predicated region
    $region6: #{tpu_custom_call.1} parent=1 // pred_check
      _
    $region7: #{tpu_custom_call.1} parent=1 // pred_check_branch
      %23 = sbr.rel (0) target = $region9
    $region8: #{tpu_custom_call.1} parent=1 // pred_region
      %s25 = ssub.s32 256, 256
      %26 = vsyncadd [#allocation6], %s25
      %s27 = sshll.u32 [#allocation5], 4
      %s28 = int_to_ptr.vmem [resolvable:$true] %s27
      %33 = dma.hbm_to_vmem [thread:$0]  %s1, 256, %s28, [#allocation6], 128, 128, 8
    $region9: #{tpu_custom_call.1} parent=1 // pred_fallthru
      _
    // Predicated region
    $region10: #{tpu_custom_call.1} parent=1 // pred_check
      _
    $region11: #{tpu_custom_call.1} parent=1 // pred_check_branch
      %35 = sbr.rel (0) target = $region13
    $region12: #{tpu_custom_call.1} parent=1 // pred_region
      %36 = dma.done [#allocation3], 256
    $region13: #{tpu_custom_call.1} parent=1 // pred_fallthru
      _
    // Predicated region
    $region14: #{tpu_custom_call.1} parent=1 // pred_check
      _
    $region15: #{tpu_custom_call.1} parent=1 // pred_check_branch
      %38 = sbr.rel (0) target = $region17
    $region16: #{tpu_custom_call.1} parent=1 // pred_region
      %39 = dma.done [#allocation6], 256
    $region17: #{tpu_custom_call.1} parent=1 // pred_fallthru
      _
    %v40 = vld [vmem:[#allocation2] sm:$0xff]
    %v41 = vld [vmem:[#allocation2 + $0x8] sm:$0xff]
    %v42 = vld [vmem:[#allocation5] sm:$0xff]
    %v43 = vld [vmem:[#allocation5 + $0x8] sm:$0xff]
    %v44 = vsub.f32 %v40, %v42
    %v45 = vsub.f32 %v41, %v43
    %v46 = vmul.f32 %v44, %v44
    %v47 = vmul.f32 %v45, %v45
    %v48 = vadd.f32 %v46, %v47
    %49 = vst [vmem:[#allocation7] sm:$0xff] %v48
    // Predicated region
    $region18: #{tpu_custom_call.1} parent=1 // pred_check
      _
    $region19: #{tpu_custom_call.1} parent=1 // pred_check_branch
      %51 = sbr.rel (0) target = $region21
    $region20: #{tpu_custom_call.1} parent=1 // pred_region
      %s53 = ssub.s32 128, 128
      %54 = vsyncadd [#allocation4], %s53
      %s56 = sshll.u32 [#allocation7], 4
      %s57 = int_to_ptr.vmem [resolvable:$true] %s56
      %59 = dma.vmem_to_hbm [thread:$0]  %s57, 128, %s2, [#allocation4]
    $region21: #{tpu_custom_call.1} parent=1 // pred_fallthru
      _
    // Predicated region
    $region22: #{tpu_custom_call.1} parent=1 // pred_check
      _
    $region23: #{tpu_custom_call.1} parent=1 // pred_check_branch
      %61 = sbr.rel (0) target = $region25
    $region24: #{tpu_custom_call.1} parent=1 // pred_region
      %62 = dma.done [#allocation4], 128
    $region25: #{tpu_custom_call.1} parent=1 // pred_fallthru
      _
    %63 = vsyncpa [#allocation3], 1
    %64 = vsyncpa [#allocation6], 1
    %65 = vsyncpa [#allocation4], 1

</llo_original>
